<compile_context>
chip_gen: v6e
topology: v6e:2x2x1
jax: 0.10.0
libtpu: 0.0.40
codegen_flags: <defaults>
</compile_context>

<pallas_src>
import functools

import jax
import jax.numpy as jnp
from jax import lax
from jax.experimental import pallas as pl
from jax.experimental.pallas import tpu as pltpu

_LANES = 128
_DEFAULT_TILE_ROWS = 4096   # 4096 x 128 f32 = 2 MiB per input block
_CHUNK_ROWS = 512           # sub-tile processed per unrolled inner step
_NUM_CORE_SLOTS = 2         # v7x megacore split; harmless serial split elsewhere


def _f1_partial_kernel(pred_ref, act_ref, out_ref, acc_ap, acc_p, acc_a, *,
                       n, tile_rows, chunk_rows, n_tiles):
    """Accumulates per-core partial sums of (a*p, p, a) over one row-tile."""
    c = pl.program_id(0)            # core slot (parallel axis)
    k = pl.program_id(1)            # step within this core's row range
    k_steps = pl.num_programs(1)
    t = c * k_steps + k             # unclamped global row-tile index

    @pl.when(k == 0)
    def _init():
        acc_ap[...] = jnp.zeros_like(acc_ap)
        acc_p[...] = jnp.zeros_like(acc_p)
        acc_a[...] = jnp.zeros_like(acc_a)

    n_chunks = tile_rows // chunk_rows

    def accumulate(masked):
        # Static Python loop over small sub-chunks keeps live VMEM temporaries
        # at (chunk_rows, 128) instead of full (tile_rows, 128) tiles.
        for i in range(n_chunks):
            r0 = i * chunk_rows
            p = jax.nn.sigmoid(
                pred_ref[pl.ds(r0, chunk_rows), :].astype(jnp.float32))
            a = act_ref[pl.ds(r0, chunk_rows), :].astype(jnp.float32)
            if masked:
                row = lax.broadcasted_iota(jnp.int32, (chunk_rows, _LANES), 0)
                lane = lax.broadcasted_iota(jnp.int32, (chunk_rows, _LANES), 1)
                flat = (t * tile_rows + r0 + row) * _LANES + lane
                valid = flat < n
                p = jnp.where(valid, p, 0.0)
                a = jnp.where(valid, a, 0.0)
            acc_ap[...] += jnp.sum(a * p, axis=0, keepdims=True)
            acc_p[...] += jnp.sum(p, axis=0, keepdims=True)
            acc_a[...] += jnp.sum(a, axis=0, keepdims=True)

    # Only boundary (or clamped/duplicate) tiles pay for the mask; interior
    # tiles run the lean unmasked path.
    @pl.when(t >= n_tiles - 1)
    def _boundary():
        accumulate(True)

    @pl.when(t < n_tiles - 1)
    def _interior():
        accumulate(False)

    @pl.when(k == k_steps - 1)
    def _finalize():
        out_ref[0, :, :] = jnp.concatenate(
            [acc_ap[...], acc_p[...], acc_a[...]], axis=0)


def _epilogue(s_ap, s_p, s_a, epsilon, reduction, n):
    """Scalar precision/recall/F1 math (plain JAX; negligible cost)."""
    eps = jnp.float32(epsilon)
    tp = s_ap
    fp = s_p - s_ap           # == sum((1 - a) * p) exactly
    fn = s_a - s_ap           # == sum(a * (1 - p)) exactly
    precision = tp / (tp + fp + eps)
    recall = tp / (tp + fn + eps)
    f1 = 2.0 * (precision * recall) / (precision + recall + eps)
    loss = 1.0 - f1
    if reduction == 'sum':
        loss = loss * jnp.float32(n)
    # 'mean' and anything else return 1 - f1 (matches the PyTorch module).
    return loss


def f1_loss(predicted, actual, epsilon=1e-10, reduction='mean',
            max_tile_rows=_DEFAULT_TILE_ROWS):
    assert predicted.ndim <= 1
    assert actual.ndim <= 1
    predicted = jnp.atleast_1d(predicted)
    actual = jnp.atleast_1d(actual)
    n = predicted.shape[0]
    if n == 0:
        zero = jnp.float32(0.0)
        return _epilogue(zero, zero, zero, epsilon, reduction, 0)

    rows = pl.cdiv(n, _LANES)

    # Only pad up to the next multiple of 128 lanes (reshape requirement); the
    # pad values are irrelevant because the kernel masks by flat index < n.
    pad = rows * _LANES - n
    if pad:
        predicted = jnp.pad(predicted, (0, pad))
        actual = jnp.pad(actual, (0, pad))
    pred2d = predicted.reshape(rows, _LANES)   # free bitcast when pad == 0
    act2d = actual.reshape(rows, _LANES)

    # Tile selection: big lane-dense blocks, row dim a multiple of the chunk
    # (so the inner loop divides evenly) and of 8 (block tiling rule), or the
    # full row extent for small inputs.
    if rows >= _CHUNK_ROWS and max_tile_rows >= _CHUNK_ROWS:
        tile_rows = (min(max_tile_rows, rows) // _CHUNK_ROWS) * _CHUNK_ROWS
        chunk_rows = _CHUNK_ROWS
    elif rows > max(8, max_tile_rows):
        tile_rows = max(8, (min(max_tile_rows, rows) // 8) * 8)
        chunk_rows = tile_rows
    else:
        tile_rows = rows            # single tile; block == full array dims
        chunk_rows = rows
    n_tiles = pl.cdiv(rows, tile_rows)
    num_cores = min(_NUM_CORE_SLOTS, n_tiles)
    steps_per_core = pl.cdiv(n_tiles, num_cores)

    kernel = functools.partial(
        _f1_partial_kernel, n=n, tile_rows=tile_rows, chunk_rows=chunk_rows,
        n_tiles=n_tiles)

    def in_map(c, k):
        # Clamp duplicate/overhanging steps to the last valid tile; their
        # contribution is zeroed in-kernel by the flat-index mask.
        return (jnp.minimum(c * steps_per_core + k, n_tiles - 1), 0)

    partials = pl.pallas_call(
        kernel,
        out_shape=jax.ShapeDtypeStruct((num_cores, 3, _LANES), jnp.float32),
        grid_spec=pltpu.PrefetchScalarGridSpec(
            num_scalar_prefetch=0,
            grid=(num_cores, steps_per_core),
            in_specs=[
                pl.BlockSpec((tile_rows, _LANES), in_map),
                pl.BlockSpec((tile_rows, _LANES), in_map),
            ],
            out_specs=pl.BlockSpec((1, 3, _LANES), lambda c, k: (c, 0, 0)),
            scratch_shapes=[pltpu.VMEM((1, _LANES), jnp.float32)] * 3,
        ),
        compiler_params=pltpu.CompilerParams(
            dimension_semantics=("parallel", "arbitrary"),
            vmem_limit_bytes=32 * 1024 * 1024),
    )(pred2d, act2d)

    sums = jnp.sum(partials, axis=(0, 2))      # (3,) = [sum(a*p), sum(p), sum(a)]
    return _epilogue(sums[0], sums[1], sums[2], epsilon, reduction, n)


def _f1_loss_ref(predicted, actual, epsilon=1e-10, reduction='mean'):
    p = jax.nn.sigmoid(predicted.astype(jnp.float32))
    a = actual.astype(jnp.float32)
    tp = jnp.sum(a * p)
    fp = jnp.sum((1.0 - a) * p)
    fn = jnp.sum(a * (1.0 - p))
    precision = tp / (tp + fp + epsilon)
    recall = tp / (tp + fn + epsilon)
    f1 = 2.0 * (precision * recall) / (precision + recall + epsilon)
    loss = 1.0 - f1
    if reduction == 'sum':
        loss = loss * predicted.shape[0]
    return loss


if __name__ == "__main__":
    key = jax.random.PRNGKey(0)

    # (n, reduction, max_tile_rows, pred dtype, actual dtype)
    cases = [
        (256,   'mean', _DEFAULT_TILE_ROWS, jnp.float32,  jnp.float32),  # no pad
        (300,   'sum',  _DEFAULT_TILE_ROWS, jnp.float32,  jnp.float32),  # padded tail
        (3000,  'mean', 8,                  jnp.float32,  jnp.float32),  # multi-tile + 2-slot split
        (65536, 'mean', _DEFAULT_TILE_ROWS, jnp.bfloat16, jnp.int8),     # narrow dtypes, chunked tile
        (70000, 'sum',  _DEFAULT_TILE_ROWS, jnp.float32,  jnp.float32),  # ragged boundary tile
    ]

    ok = True
    for n_elems, reduction, tile, pdt, adt in cases:
        key, k1, k2 = jax.random.split(key, 3)
        predicted = jax.random.normal(k1, (n_elems,), dtype=jnp.float32).astype(pdt)
        actual = jax.random.bernoulli(k2, p=0.3, shape=(n_elems,)).astype(adt)

        loss = f1_loss(predicted, actual, epsilon=1e-10, reduction=reduction,
                       max_tile_rows=tile)
        loss = jax.block_until_ready(loss)
        ref = _f1_loss_ref(predicted, actual, epsilon=1e-10, reduction=reduction)

        if not jnp.allclose(loss, ref, atol=1e-5, rtol=1e-4):
            ok = False
            print(f"MISMATCH n={n_elems} reduction={reduction}: "
                  f"kernel={loss} ref={ref}")

    assert ok
    print("KERNEL_OK")
</pallas_src>

<mosaic_0001>
module attributes {stable_mosaic.version = 11 : i64} {
  func.func @_f1_partial_kernel(%arg0: i32, %arg1: i32, %arg2: memref<2x128xf32, #tpu.memory_space<vmem>>, %arg3: memref<2x128xf32, #tpu.memory_space<vmem>>, %arg4: memref<1x3x128xf32, #tpu.memory_space<vmem>>, %arg5: memref<1x128xf32, #tpu.memory_space<vmem>>, %arg6: memref<1x128xf32, #tpu.memory_space<vmem>>, %arg7: memref<1x128xf32, #tpu.memory_space<vmem>>) attributes {dimension_semantics = [#tpu.dimension_semantics<parallel>, #tpu.dimension_semantics<arbitrary>], iteration_bounds = array<i64: 1, 1>, scalar_prefetch = 0 : i64, scratch_operands = 3 : i64, tpu.core_type = #tpu.core_type<tc>, window_params = [{transform_indices = @transform_0, window_bounds = array<i64: 2, 128>}, {transform_indices = @transform_1, window_bounds = array<i64: 2, 128>}, {transform_indices = @transform_2, window_bounds = array<i64: 1, 3, 128>}]} {
    %c1_i32 = arith.constant 1 : i32
    %0 = arith.muli %arg0, %c1_i32 : i32
    %1 = arith.addi %0, %arg1 : i32
    %c0_i32 = arith.constant 0 : i32
    %2 = arith.cmpi eq, %arg1, %c0_i32 : i32
    %3 = arith.extui %2 : i1 to i32
    %c0_i32_0 = arith.constant 0 : i32
    %4 = arith.cmpi ne, %3, %c0_i32_0 : i32
    scf.if %4 {
      %cst = arith.constant 0.000000e+00 : f32
      %14 = vector.broadcast %cst : f32 to vector<1x128xf32>
      %c0 = arith.constant 0 : index
      %c0_7 = arith.constant 0 : index
      %15 = vector.load %arg5[%c0, %c0_7] : memref<1x128xf32, #tpu.memory_space<vmem>>, vector<1x128xf32>
      tpu.vector_store %arg5[%c0, %c0_7], %14 {strides = array<i32>} : memref<1x128xf32, #tpu.memory_space<vmem>>, vector<1x128xf32>,
      %cst_8 = arith.constant 0.000000e+00 : f32
      %16 = vector.broadcast %cst_8 : f32 to vector<1x128xf32>
      %c0_9 = arith.constant 0 : index
      %c0_10 = arith.constant 0 : index
      %17 = vector.load %arg6[%c0_9, %c0_10] : memref<1x128xf32, #tpu.memory_space<vmem>>, vector<1x128xf32>
      tpu.vector_store %arg6[%c0_9, %c0_10], %16 {strides = array<i32>} : memref<1x128xf32, #tpu.memory_space<vmem>>, vector<1x128xf32>,
      %cst_11 = arith.constant 0.000000e+00 : f32
      %18 = vector.broadcast %cst_11 : f32 to vector<1x128xf32>
      %c0_12 = arith.constant 0 : index
      %c0_13 = arith.constant 0 : index
      %19 = vector.load %arg7[%c0_12, %c0_13] : memref<1x128xf32, #tpu.memory_space<vmem>>, vector<1x128xf32>
      tpu.vector_store %arg7[%c0_12, %c0_13], %18 {strides = array<i32>} : memref<1x128xf32, #tpu.memory_space<vmem>>, vector<1x128xf32>,
    } else {
    }
    %c0_i32_1 = arith.constant 0 : i32
    %5 = arith.cmpi sge, %1, %c0_i32_1 : i32
    %6 = arith.extui %5 : i1 to i32
    %c0_i32_2 = arith.constant 0 : i32
    %7 = arith.cmpi ne, %6, %c0_i32_2 : i32
    scf.if %7 {
      %c0 = arith.constant 0 : index
      %c0_7 = arith.constant 0 : index
      %14 = vector.load %arg2[%c0, %c0_7] : memref<2x128xf32, #tpu.memory_space<vmem>>, vector<2x128xf32>
      %15 = arith.negf %14 : vector<2x128xf32>
      %16 = math.exp %15 : vector<2x128xf32>
      %cst = arith.constant 1.000000e+00 : f32
      %17 = vector.broadcast %cst : f32 to vector<2x128xf32>
      %18 = arith.addf %17, %16 : vector<2x128xf32>
      %19 = arith.divf %17, %18 : vector<2x128xf32>
      %c0_8 = arith.constant 0 : index
      %c0_9 = arith.constant 0 : index
      %20 = vector.load %arg3[%c0_8, %c0_9] : memref<2x128xf32, #tpu.memory_space<vmem>>, vector<2x128xf32>
      %21 = tpu.iota {dimensions = array<i32: 0>} : vector<2x128xi32>
      %22 = tpu.iota {dimensions = array<i32: 1>} : vector<2x128xi32>
      %c2_i32 = arith.constant 2 : i32
      %23 = arith.muli %1, %c2_i32 : i32
      %c0_i32_10 = arith.constant 0 : i32
      %24 = arith.addi %23, %c0_i32_10 : i32
      %25 = vector.broadcast %24 : i32 to vector<2x128xi32>
      %26 = arith.addi %25, %21 : vector<2x128xi32>
      %c128_i32 = arith.constant 128 : i32
      %27 = vector.broadcast %c128_i32 : i32 to vector<2x128xi32>
      %28 = arith.muli %26, %27 : vector<2x128xi32>
      %29 = arith.addi %28, %22 : vector<2x128xi32>
      %c256_i32 = arith.constant 256 : i32
      %30 = vector.broadcast %c256_i32 : i32 to vector<2x128xi32>
      %31 = arith.cmpi slt, %29, %30 : vector<2x128xi32>
      %cst_11 = arith.constant 0.000000e+00 : f32
      %32 = vector.broadcast %cst_11 : f32 to vector<2x128xf32>
      %33 = arith.select %31, %19, %32 : vector<2x128xi1>, vector<2x128xf32>
      %cst_12 = arith.constant 0.000000e+00 : f32
      %34 = vector.broadcast %cst_12 : f32 to vector<2x128xf32>
      %35 = arith.select %31, %20, %34 : vector<2x128xi1>, vector<2x128xf32>
      %c0_13 = arith.constant 0 : index
      %c0_14 = arith.constant 0 : index
      %36 = vector.load %arg5[%c0_13, %c0_14] : memref<1x128xf32, #tpu.memory_space<vmem>>, vector<1x128xf32>
      %37 = arith.mulf %35, %33 : vector<2x128xf32>
      %cst_15 = arith.constant dense<0.000000e+00> : vector<128xf32>
      %38 = vector.multi_reduction <add>, %37, %cst_15 [0] : vector<2x128xf32> to vector<128xf32>
      %39 = vector.shape_cast %38 : vector<128xf32> to vector<1x128xf32>
      %40 = arith.addf %36, %39 : vector<1x128xf32>
      %c0_16 = arith.constant 0 : index
      %c0_17 = arith.constant 0 : index
      %41 = vector.load %arg5[%c0_16, %c0_17] : memref<1x128xf32, #tpu.memory_space<vmem>>, vector<1x128xf32>
      tpu.vector_store %arg5[%c0_16, %c0_17], %40 {strides = array<i32>} : memref<1x128xf32, #tpu.memory_space<vmem>>, vector<1x128xf32>,
      %c0_18 = arith.constant 0 : index
      %c0_19 = arith.constant 0 : index
      %42 = vector.load %arg6[%c0_18, %c0_19] : memref<1x128xf32, #tpu.memory_space<vmem>>, vector<1x128xf32>
      %cst_20 = arith.constant dense<0.000000e+00> : vector<128xf32>
      %43 = vector.multi_reduction <add>, %33, %cst_20 [0] : vector<2x128xf32> to vector<128xf32>
      %44 = vector.shape_cast %43 : vector<128xf32> to vector<1x128xf32>
      %45 = arith.addf %42, %44 : vector<1x128xf32>
      %c0_21 = arith.constant 0 : index
      %c0_22 = arith.constant 0 : index
      %46 = vector.load %arg6[%c0_21, %c0_22] : memref<1x128xf32, #tpu.memory_space<vmem>>, vector<1x128xf32>
      tpu.vector_store %arg6[%c0_21, %c0_22], %45 {strides = array<i32>} : memref<1x128xf32, #tpu.memory_space<vmem>>, vector<1x128xf32>,
      %c0_23 = arith.constant 0 : index
      %c0_24 = arith.constant 0 : index
      %47 = vector.load %arg7[%c0_23, %c0_24] : memref<1x128xf32, #tpu.memory_space<vmem>>, vector<1x128xf32>
      %cst_25 = arith.constant dense<0.000000e+00> : vector<128xf32>
      %48 = vector.multi_reduction <add>, %35, %cst_25 [0] : vector<2x128xf32> to vector<128xf32>
      %49 = vector.shape_cast %48 : vector<128xf32> to vector<1x128xf32>
      %50 = arith.addf %47, %49 : vector<1x128xf32>
      %c0_26 = arith.constant 0 : index
      %c0_27 = arith.constant 0 : index
      %51 = vector.load %arg7[%c0_26, %c0_27] : memref<1x128xf32, #tpu.memory_space<vmem>>, vector<1x128xf32>
      tpu.vector_store %arg7[%c0_26, %c0_27], %50 {strides = array<i32>} : memref<1x128xf32, #tpu.memory_space<vmem>>, vector<1x128xf32>,
    } else {
    }
    %c0_i32_3 = arith.constant 0 : i32
    %8 = arith.cmpi slt, %1, %c0_i32_3 : i32
    %9 = arith.extui %8 : i1 to i32
    %c0_i32_4 = arith.constant 0 : i32
    %10 = arith.cmpi ne, %9, %c0_i32_4 : i32
    scf.if %10 {
      %c0 = arith.constant 0 : index
      %c0_7 = arith.constant 0 : index
      %14 = vector.load %arg2[%c0, %c0_7] : memref<2x128xf32, #tpu.memory_space<vmem>>, vector<2x128xf32>
      %15 = arith.negf %14 : vector<2x128xf32>
      %16 = math.exp %15 : vector<2x128xf32>
      %cst = arith.constant 1.000000e+00 : f32
      %17 = vector.broadcast %cst : f32 to vector<2x128xf32>
      %18 = arith.addf %17, %16 : vector<2x128xf32>
      %19 = arith.divf %17, %18 : vector<2x128xf32>
      %c0_8 = arith.constant 0 : index
      %c0_9 = arith.constant 0 : index
      %20 = vector.load %arg3[%c0_8, %c0_9] : memref<2x128xf32, #tpu.memory_space<vmem>>, vector<2x128xf32>
      %c0_10 = arith.constant 0 : index
      %c0_11 = arith.constant 0 : index
      %21 = vector.load %arg5[%c0_10, %c0_11] : memref<1x128xf32, #tpu.memory_space<vmem>>, vector<1x128xf32>
      %22 = arith.mulf %20, %19 : vector<2x128xf32>
      %cst_12 = arith.constant dense<0.000000e+00> : vector<128xf32>
      %23 = vector.multi_reduction <add>, %22, %cst_12 [0] : vector<2x128xf32> to vector<128xf32>
      %24 = vector.shape_cast %23 : vector<128xf32> to vector<1x128xf32>
      %25 = arith.addf %21, %24 : vector<1x128xf32>
      %c0_13 = arith.constant 0 : index
      %c0_14 = arith.constant 0 : index
      %26 = vector.load %arg5[%c0_13, %c0_14] : memref<1x128xf32, #tpu.memory_space<vmem>>, vector<1x128xf32>
      tpu.vector_store %arg5[%c0_13, %c0_14], %25 {strides = array<i32>} : memref<1x128xf32, #tpu.memory_space<vmem>>, vector<1x128xf32>,
      %c0_15 = arith.constant 0 : index
      %c0_16 = arith.constant 0 : index
      %27 = vector.load %arg6[%c0_15, %c0_16] : memref<1x128xf32, #tpu.memory_space<vmem>>, vector<1x128xf32>
      %cst_17 = arith.constant dense<0.000000e+00> : vector<128xf32>
      %28 = vector.multi_reduction <add>, %19, %cst_17 [0] : vector<2x128xf32> to vector<128xf32>
      %29 = vector.shape_cast %28 : vector<128xf32> to vector<1x128xf32>
      %30 = arith.addf %27, %29 : vector<1x128xf32>
      %c0_18 = arith.constant 0 : index
      %c0_19 = arith.constant 0 : index
      %31 = vector.load %arg6[%c0_18, %c0_19] : memref<1x128xf32, #tpu.memory_space<vmem>>, vector<1x128xf32>
      tpu.vector_store %arg6[%c0_18, %c0_19], %30 {strides = array<i32>} : memref<1x128xf32, #tpu.memory_space<vmem>>, vector<1x128xf32>,
      %c0_20 = arith.constant 0 : index
      %c0_21 = arith.constant 0 : index
      %32 = vector.load %arg7[%c0_20, %c0_21] : memref<1x128xf32, #tpu.memory_space<vmem>>, vector<1x128xf32>
      %cst_22 = arith.constant dense<0.000000e+00> : vector<128xf32>
      %33 = vector.multi_reduction <add>, %20, %cst_22 [0] : vector<2x128xf32> to vector<128xf32>
      %34 = vector.shape_cast %33 : vector<128xf32> to vector<1x128xf32>
      %35 = arith.addf %32, %34 : vector<1x128xf32>
      %c0_23 = arith.constant 0 : index
      %c0_24 = arith.constant 0 : index
      %36 = vector.load %arg7[%c0_23, %c0_24] : memref<1x128xf32, #tpu.memory_space<vmem>>, vector<1x128xf32>
      tpu.vector_store %arg7[%c0_23, %c0_24], %35 {strides = array<i32>} : memref<1x128xf32, #tpu.memory_space<vmem>>, vector<1x128xf32>,
    } else {
    }
    %c0_i32_5 = arith.constant 0 : i32
    %11 = arith.cmpi eq, %arg1, %c0_i32_5 : i32
    %12 = arith.extui %11 : i1 to i32
    %c0_i32_6 = arith.constant 0 : i32
    %13 = arith.cmpi ne, %12, %c0_i32_6 : i32
    scf.if %13 {
      %c0 = arith.constant 0 : index
      %c0_7 = arith.constant 0 : index
      %14 = vector.load %arg5[%c0, %c0_7] : memref<1x128xf32, #tpu.memory_space<vmem>>, vector<1x128xf32>
      %c0_8 = arith.constant 0 : index
      %c0_9 = arith.constant 0 : index
      %15 = vector.load %arg6[%c0_8, %c0_9] : memref<1x128xf32, #tpu.memory_space<vmem>>, vector<1x128xf32>
      %c0_10 = arith.constant 0 : index
      %c0_11 = arith.constant 0 : index
      %16 = vector.load %arg7[%c0_10, %c0_11] : memref<1x128xf32, #tpu.memory_space<vmem>>, vector<1x128xf32>
      %17 = tpu.concatenate %14, %15, %16 in 0 : vector<1x128xf32>, vector<1x128xf32>, vector<1x128xf32> -> vector<3x128xf32>
      %c0_12 = arith.constant 0 : index
      %c0_13 = arith.constant 0 : index
      %c0_14 = arith.constant 0 : index
      %18 = vector.load %arg4[%c0_12, %c0_13, %c0_14] : memref<1x3x128xf32, #tpu.memory_space<vmem>>, vector<1x3x128xf32>
      %19 = vector.shape_cast %18 : vector<1x3x128xf32> to vector<3x128xf32>
      %20 = vector.shape_cast %17 : vector<3x128xf32> to vector<1x3x128xf32>
      tpu.vector_store %arg4[%c0_12, %c0_13, %c0_14], %20 {strides = array<i32>} : memref<1x3x128xf32, #tpu.memory_space<vmem>>, vector<1x3x128xf32>,
    } else {
    }
    return
  }
  func.func @transform_0(%arg0: i32, %arg1: i32) -> (i32, i32) {
    %c1_i32 = arith.constant 1 : i32
    %0 = arith.muli %arg0, %c1_i32 : i32
    %1 = arith.addi %0, %arg1 : i32
    %c0_i32 = arith.constant 0 : i32
    %2 = arith.minsi %1, %c0_i32 : i32
    %c0_i32_0 = arith.constant 0 : i32
    %c0_i32_1 = arith.constant 0 : i32
    return %2, %c0_i32_0 : i32, i32
  }
  func.func @transform_1(%arg0: i32, %arg1: i32) -> (i32, i32) {
    %c1_i32 = arith.constant 1 : i32
    %0 = arith.muli %arg0, %c1_i32 : i32
    %1 = arith.addi %0, %arg1 : i32
    %c0_i32 = arith.constant 0 : i32
    %2 = arith.minsi %1, %c0_i32 : i32
    %c0_i32_0 = arith.constant 0 : i32
    %c0_i32_1 = arith.constant 0 : i32
    return %2, %c0_i32_0 : i32, i32
  }
  func.func @transform_2(%arg0: i32, %arg1: i32) -> (i32, i32, i32) {
    %c0_i32 = arith.constant 0 : i32
    %c0_i32_0 = arith.constant 0 : i32
    %c0_i32_1 = arith.constant 0 : i32
    return %arg0, %c0_i32, %c0_i32_0 : i32, i32, i32
  }
}

</mosaic_0001>

<llo_original>
// kernel: tpu_custom_call.1
$region0: #{tpu_custom_call.1}
  #allocation0 [shape = 'u32[]', space=smem, size = 0x4, offset = 0x4, fixed_abs, tag = 'smem constant byte address 0x4 - core index']
  #allocation1 [shape = 'u32[144,128]{1,0:T(1,128)}', space=vmem, size = 0x12000, scoped, tag = 'internal scratch']
  #allocation2 [shape = 'f32[1,128]{1,0:T(1,128)}', space=vmem, size = 0x200, scoped, tag = 'scratch operand']
  #allocation3 [shape = 'f32[1,128]{1,0:T(1,128)}', space=vmem, size = 0x200, scoped, tag = 'scratch operand']
  #allocation4 [shape = 'f32[1,128]{1,0:T(1,128)}', space=vmem, size = 0x200, scoped, tag = 'scratch operand']
  %s0 = inlined_call_operand.hbm [shape: f32[2,128], index: 0, kind: input, shape index: {}]
  %s1 = inlined_call_operand.hbm [shape: f32[2,128], index: 1, kind: input, shape index: {}]
  %s2 = inlined_call_operand.vmem [shape: f32[1,3,128], index: 2, kind: output, shape index: {}]
  %s3 = sld [smem:[#allocation0]]
  $region42: #{tpu_custom_call.1} parent=0
    _
  %s5 = ssub.s32 1, %s3
  %s6 = scalar_select 0, %s5, %s3
  $region1: #{tpu_custom_call.1} parent=0
    #allocation5 [shape = 'u8[1024]{0}', space=vmem, size = 0x400, scoped, tag = 'input window, operand 0, single buffered']
    #allocation6 [shape = 's32[1]{0}', space=sflag, size = 0x4, scoped, tag = 'scoped memory for tpu_custom_call.1']
    #allocation7 [shape = 'u8[1024]{0}', space=vmem, size = 0x400, scoped, tag = 'input window, operand 1, single buffered']
    #allocation8 [shape = 's32[1]{0}', space=sflag, size = 0x4, scoped, tag = 'scoped memory for tpu_custom_call.1']
    %7 = vsyncpa [#allocation6], 0
    %8 = vsyncpa [#allocation8], 0
    // Predicated region
    $region2: #{tpu_custom_call.1} parent=1 // pred_check
      _
    $region3: #{tpu_custom_call.1} parent=1 // pred_check_branch
      %10 = sbr.rel (0) target = $region5
    $region4: #{tpu_custom_call.1} parent=1 // pred_region
      %s11 = sadd.s32 0, 0
      %p12 = scmp.lt.s32.totalorder %s11, 0
      %s13 = scalar_select %p12, %s11, 0
      %s15 = ssub.s32 32, 32
      %16 = vsyncadd [#allocation6], %s15
      %s17 = smul.addr %s13, 32
      %s18 = scalar_lea.hbm %s0, %s17
      %s20 = sshll.u32 [#allocation5], 4
      %s21 = int_to_ptr.vmem [resolvable:$true] %s20
      %23 = dma.hbm_to_vmem [thread:$0]  %s18, 32, %s21, [#allocation6]
    $region5: #{tpu_custom_call.1} parent=1 // pred_fallthru
      _
    // Predicated region
    $region6: #{tpu_custom_call.1} parent=1 // pred_check
      _
    $region7: #{tpu_custom_call.1} parent=1 // pred_check_branch
      %25 = sbr.rel (0) target = $region9
    $region8: #{tpu_custom_call.1} parent=1 // pred_region
      %s26 = sadd.s32 0, 0
      %p27 = scmp.lt.s32.totalorder %s26, 0
      %s28 = scalar_select %p27, %s26, 0
      %s30 = ssub.s32 32, 32
      %31 = vsyncadd [#allocation8], %s30
      %s32 = smul.addr %s28, 32
      %s33 = scalar_lea.hbm %s1, %s32
      %s35 = sshll.u32 [#allocation7], 4
      %s36 = int_to_ptr.vmem [resolvable:$true] %s35
      %38 = dma.hbm_to_vmem [thread:$0]  %s33, 32, %s36, [#allocation8]
    $region9: #{tpu_custom_call.1} parent=1 // pred_fallthru
      _
    // Predicated region
    $region10: #{tpu_custom_call.1} parent=1 // pred_check
      _
    $region11: #{tpu_custom_call.1} parent=1 // pred_check_branch
      %40 = sbr.rel (0) target = $region13
    $region12: #{tpu_custom_call.1} parent=1 // pred_region
      %41 = dma.done [#allocation6], 32
    $region13: #{tpu_custom_call.1} parent=1 // pred_fallthru
      _
    // Predicated region
    $region14: #{tpu_custom_call.1} parent=1 // pred_check
      _
    $region15: #{tpu_custom_call.1} parent=1 // pred_check_branch
      %43 = sbr.rel (0) target = $region17
    $region16: #{tpu_custom_call.1} parent=1 // pred_region
      %44 = dma.done [#allocation8], 32
    $region17: #{tpu_custom_call.1} parent=1 // pred_fallthru
      _
    %s45 = sadd.s32 0, 0
    %p46 = scmp.lt.s32.totalorder %s45, 0
    %s47 = scalar_select %p46, %s45, 0
    %s48 = sadd.s32 0, 0
    %p49 = scmp.lt.s32.totalorder %s48, 0
    %s50 = scalar_select %p49, %s48, 0
    %s51 = sadd.s32 0, 0
    %p52 = scmp.eq.s32.totalorder 0, 0
    // Predicated region
    $region18: #{tpu_custom_call.1} parent=1 // pred_check
      %p53 = pneg %p52
    $region19: #{tpu_custom_call.1} parent=1 // pred_check_branch
      %55 = sbr.rel (%p53) target = $region21
    $region20: #{tpu_custom_call.1} parent=1 // pred_region
      %56 = vst [vmem:[#allocation2] sm:$0x1] 0.0
      %57 = vst [vmem:[#allocation3] sm:$0x1] 0.0
      %58 = vst [vmem:[#allocation4] sm:$0x1] 0.0
    $region21: #{tpu_custom_call.1} parent=1 // pred_fallthru
      _
    %p59 = scmp.ge.s32.totalorder %s51, 0
    // Predicated region
    $region22: #{tpu_custom_call.1} parent=1 // pred_check
      %p60 = pneg %p59
    $region23: #{tpu_custom_call.1} parent=1 // pred_check_branch
      %62 = sbr.rel (%p60) target = $region25
    $region24: #{tpu_custom_call.1} parent=1 // pred_region
      %v63 = vld [vmem:[#allocation5] sm:$0x3]
      %v64 = vxor.u32 %v63, 2147483648
      %v65 = vmul.f32 %v64, 1.442695
      %v66 = vpow.pop %v65
      %v67 = vadd.f32 %v66, 1.0
      %v68 = vrcp.pop %v67
      %v69 = vmul.f32 1.0, %v68
      %v70 = vld [vmem:[#allocation7] sm:$0x3]
      %v71 = vlaneseq
      %v72 = vshrl.u32 %v71, 7
      %v73 = vlaneseq
      %v74 = vand.u32 %v73, 127
      %s75 = smul.u32 %s51, 2
      %v76 = vstv %s75
      %v77 = vadd.s32 %v76, %v72
      %v78 = vmul.u32 %v77, 128
      %v79 = vadd.s32 %v78, %v74
      %vm80 = vcmp.lt.s32.totalorder %v79, 256
      %v81 = vsel %vm80, %v69, 0.0
      %v82 = vsel %vm80, %v70, 0.0
      %v83 = vld [vmem:[#allocation2] sm:$0x1]
      %v84 = vmul.f32 %v82, %v81
      %vm85 = vcmask 1041408
      %v86 = vsel %vm85, %v84, 0.0
      %v87 = vrot.slane %v86, 4
      %v88 = vadd.f32 %v86, %v87
      %v89 = vrot.slane %v88, 2
      %v90 = vadd.f32 %v88, %v89
      %v91 = vrot.slane %v90, 1
      %v92 = vadd.f32 %v90, %v91
      %v93 = vadd.f32 %v83, %v92
      %94 = vst [vmem:[#allocation2] sm:$0x1] %v93
      %v95 = vld [vmem:[#allocation3] sm:$0x1]
      %v96 = vsel %vm85, %v81, 0.0
      %v97 = vrot.slane %v96, 4
      %v98 = vadd.f32 %v96, %v97
      %v99 = vrot.slane %v98, 2
      %v100 = vadd.f32 %v98, %v99
      %v101 = vrot.slane %v100, 1
      %v102 = vadd.f32 %v100, %v101
      %v103 = vadd.f32 %v95, %v102
      %104 = vst [vmem:[#allocation3] sm:$0x1] %v103
      %v105 = vld [vmem:[#allocation4] sm:$0x1]
      %v106 = vsel %vm85, %v82, 0.0
      %v107 = vrot.slane %v106, 4
      %v108 = vadd.f32 %v106, %v107
      %v109 = vrot.slane %v108, 2
      %v110 = vadd.f32 %v108, %v109
      %v111 = vrot.slane %v110, 1
      %v112 = vadd.f32 %v110, %v111
      %v113 = vadd.f32 %v105, %v112
      %114 = vst [vmem:[#allocation4] sm:$0x1] %v113
    $region25: #{tpu_custom_call.1} parent=1 // pred_fallthru
      _
    %p115 = scmp.lt.s32.totalorder %s51, 0
    // Predicated region
    $region26: #{tpu_custom_call.1} parent=1 // pred_check
      %p116 = pneg %p115
    $region27: #{tpu_custom_call.1} parent=1 // pred_check_branch
      %118 = sbr.rel (%p116) target = $region29
    $region28: #{tpu_custom_call.1} parent=1 // pred_region
      %v119 = vld [vmem:[#allocation5] sm:$0x3]
      %v120 = vxor.u32 %v119, 2147483648
      %v121 = vmul.f32 %v120, 1.442695
      %v122 = vpow.pop %v121
      %v123 = vadd.f32 %v122, 1.0
      %v124 = vrcp.pop %v123
      %v125 = vmul.f32 1.0, %v124
      %v126 = vld [vmem:[#allocation7] sm:$0x3]
      %v127 = vld [vmem:[#allocation2] sm:$0x1]
      %v128 = vmul.f32 %v126, %v125
      %vm129 = vcmask 1041408
      %v130 = vsel %vm129, %v128, 0.0
      %v131 = vrot.slane %v130, 4
      %v132 = vadd.f32 %v130, %v131
      %v133 = vrot.slane %v132, 2
      %v134 = vadd.f32 %v132, %v133
      %v135 = vrot.slane %v134, 1
      %v136 = vadd.f32 %v134, %v135
      %v137 = vadd.f32 %v127, %v136
      %138 = vst [vmem:[#allocation2] sm:$0x1] %v137
      %v139 = vld [vmem:[#allocation3] sm:$0x1]
      %v140 = vsel %vm129, %v125, 0.0
      %v141 = vrot.slane %v140, 4
      %v142 = vadd.f32 %v140, %v141
      %v143 = vrot.slane %v142, 2
      %v144 = vadd.f32 %v142, %v143
      %v145 = vrot.slane %v144, 1
      %v146 = vadd.f32 %v144, %v145
      %v147 = vadd.f32 %v139, %v146
      %148 = vst [vmem:[#allocation3] sm:$0x1] %v147
      %v149 = vld [vmem:[#allocation4] sm:$0x1]
      %v150 = vsel %vm129, %v126, 0.0
      %v151 = vrot.slane %v150, 4
      %v152 = vadd.f32 %v150, %v151
      %v153 = vrot.slane %v152, 2
      %v154 = vadd.f32 %v152, %v153
      %v155 = vrot.slane %v154, 1
      %v156 = vadd.f32 %v154, %v155
      %v157 = vadd.f32 %v149, %v156
      %158 = vst [vmem:[#allocation4] sm:$0x1] %v157
    $region29: #{tpu_custom_call.1} parent=1 // pred_fallthru
      _
    // Predicated region
    $region30: #{tpu_custom_call.1} parent=1 // pred_check
      %p159 = pneg %p52
    $region31: #{tpu_custom_call.1} parent=1 // pred_check_branch
      %161 = sbr.rel (%p159) target = $region33
    $region32: #{tpu_custom_call.1} parent=1 // pred_region
      %v162 = vld [vmem:[#allocation2] sm:$0x1]
      %v163 = vld [vmem:[#allocation3] sm:$0x1]
      %v164 = vld [vmem:[#allocation4] sm:$0x1]
      %v166 = vlaneseq
      %v167 = vshrl.u32 %v166, 7
      %v168 = vsub.s32 0, %v167
      %v169 = vrot.slane %v163, %v168
      %v172 = vlaneseq
      %v173 = vshrl.u32 %v172, 7
      %v174 = vsub.s32 0, %v173
      %v175 = vrot.slane %v164, %v174
      %vm177 = vcmask 1040384
      %v178 = vsel %vm177, %v162, %v169
      %vm179 = vcmask 1041408
      %v180 = vsel %vm179, %v178, %v175
      %181 = vst [vmem:[%s2] sm:$0x7] %v180
    $region33: #{tpu_custom_call.1} parent=1 // pred_fallthru
      _
    // Predicated region
    $region34: #{tpu_custom_call.1} parent=1 // pred_check
      _
    $region35: #{tpu_custom_call.1} parent=1 // pred_check_branch
      %183 = sbr.rel (0) target = $region37
    $region36: #{tpu_custom_call.1} parent=1 // pred_region
      _
    $region37: #{tpu_custom_call.1} parent=1 // pred_fallthru
      _
    // Predicated region
    $region38: #{tpu_custom_call.1} parent=1 // pred_check
      _
    $region39: #{tpu_custom_call.1} parent=1 // pred_check_branch
      %185 = sbr.rel (0) target = $region41
    $region40: #{tpu_custom_call.1} parent=1 // pred_region
      _
    $region41: #{tpu_custom_call.1} parent=1 // pred_fallthru
      _
    %186 = vsyncpa [#allocation6], 1
    %187 = vsyncpa [#allocation8], 1

</llo_original>
